<compile_context>
chip_gen: v7x
topology: tpu7x:2x2x1
jax: 0.10.0
libtpu: 0.0.40
codegen_flags: <defaults>
</compile_context>

<pallas_src>
import math

import jax
import jax.numpy as jnp
from jax.experimental import pallas as pl
from jax.experimental.pallas import tpu as pltpu


def _drop_path_kernel(x_ref, m_ref, o_ref):
    # x_ref/o_ref: (bRows, tW) tile in x.dtype; m_ref: (bRows, 1) f32 per-row scale.
    # Multiply in the native dtype (keeps bf16 vregs packed on v6e/v7x; correct
    # on v5e too, where Mosaic widens internally).
    scale = m_ref[...].astype(o_ref.dtype)
    o_ref[...] = x_ref[...] * scale


def _choose_row_width(F: int, B: int, max_w: int = 2048) -> int:
    """Pick a lane-dense row width W (divides F, multiple of 128) so the
    reshaped slab (B * F // W, W) has >= 8 rows (sublane-dense) when possible."""
    if F % 128 != 0:
        # Fallback: one row per sample; last dim gets (possibly masked) partial
        # stores. Correct but slower for odd feature sizes.
        return F
    widths = [w for w in range(128, min(F, max_w) + 1, 128) if F % w == 0]
    dense = [w for w in widths if B * (F // w) >= 8]
    return max(dense) if dense else max(widths)


def drop_path(x, drop_prob: float, training: bool, scale_by_keep: bool, key,
              *, donate: bool = False):
    """Pallas DropPath. x: [B, ...] (e.g. NCHW); one keep/scale mask per sample."""
    if drop_prob == 0.0 or not training:
        return x

    B = x.shape[0]
    F = math.prod(x.shape[1:])

    keep_prob = 1.0 - drop_prob
    # Per-sample Bernoulli keep mask (B scalars of glue; the hot path is in-kernel).
    mask = jax.random.bernoulli(key, p=keep_prob, shape=(B,)).astype(jnp.float32)
    if scale_by_keep and keep_prob > 0.0:
        mask = mask / keep_prob

    # Lane/sublane-dense layout: (B, F) -> (B*R, W) with W | F, W % 128 == 0.
    W = _choose_row_width(F, B)
    R = F // W
    rows = B * R
    x2d = x.reshape(rows, W)
    mask_rows = jnp.repeat(mask, R).reshape(rows, 1)  # per-row scale, f32

    # Row/lane tiles sized so each buffer is <= ~2 MiB f32; double-buffered
    # in + out stays far below scoped-VMEM defaults (16 MiB v5e / 32 MiB v6e/v7x).
    b_rows = rows if rows <= 256 else 256          # full dim or multiple of 8
    t_w = W if W <= 2048 else 2048                 # full dim or multiple of 128
    grid = (pl.cdiv(rows, b_rows), pl.cdiv(W, t_w))

    itemsize = x.dtype.itemsize
    cost = pl.CostEstimate(
        flops=rows * W,
        transcendentals=0,
        bytes_accessed=2 * rows * W * itemsize + rows * 4,
    )

    out2d = pl.pallas_call(
        _drop_path_kernel,
        out_shape=jax.ShapeDtypeStruct((rows, W), x.dtype),
        grid=grid,
        in_specs=[
            pl.BlockSpec((b_rows, t_w), lambda i, j: (i, j)),   # x tile
            pl.BlockSpec((b_rows, 1), lambda i, j: (i, 0)),     # per-row scale
        ],
        out_specs=pl.BlockSpec((b_rows, t_w), lambda i, j: (i, j)),
        compiler_params=pltpu.CompilerParams(
            dimension_semantics=("parallel", "parallel"),
        ),
        cost_estimate=cost,
        # Set donate=True when the caller no longer needs x: aliases x's HBM
        # buffer to the output (XLA inserts a copy if x stays live, so it is
        # always safe).
        input_output_aliases=({0: 0} if donate else {}),
    )(x2d, mask_rows)

    return out2d.reshape(x.shape)


class DropPath:
    """JAX/Pallas equivalent of the PyTorch DropPath module."""

    def __init__(self, drop_prob: float = 0.0, scale_by_keep: bool = True):
        self.drop_prob = drop_prob
        self.scale_by_keep = scale_by_keep
        self.training = True

    def __call__(self, x, key):
        return drop_path(x, self.drop_prob, self.training, self.scale_by_keep, key)

    def extra_repr(self):
        return f"drop_prob={round(self.drop_prob, 3):0.3f}"


if __name__ == "__main__":
    key = jax.random.PRNGKey(0)
    k_x, k_mask = jax.random.split(key)

    # Small NCHW input: B=2, C=4, H=W=16  (F = C*H*W = 1024 -> W=256, rows=8)
    x = jax.random.normal(k_x, (2, 4, 16, 16), dtype=jnp.float32)

    module = DropPath(drop_prob=0.25, scale_by_keep=True)
    module.training = True

    out = jax.block_until_ready(module(x, k_mask))

    # Reference check (pure JAX), same mask draw as in the kernel wrapper.
    keep_prob = 1.0 - module.drop_prob
    mask = jax.random.bernoulli(k_mask, p=keep_prob, shape=(x.shape[0],)).astype(
        jnp.float32
    ) / keep_prob
    ref = x * mask.reshape(-1, 1, 1, 1)
    assert out.shape == x.shape and out.dtype == x.dtype
    assert jnp.allclose(out, ref, atol=1e-6), "mismatch vs reference"

    # Eval mode (or drop_prob == 0) is identity.
    module.training = False
    out_eval = jax.block_until_ready(module(x, k_mask))
    assert jnp.array_equal(out_eval, x)

    print("KERNEL_OK")
</pallas_src>

<mosaic_0001>
module attributes {stable_mosaic.version = 11 : i64} {
  func.func @_drop_path_kernel(%arg0: i32, %arg1: i32, %arg2: memref<8x256xf32, #tpu.memory_space<vmem>>, %arg3: memref<8x1xf32, #tpu.memory_space<vmem>>, %arg4: memref<8x256xf32, #tpu.memory_space<vmem>>) attributes {dimension_semantics = [#tpu.dimension_semantics<parallel>, #tpu.dimension_semantics<parallel>], iteration_bounds = array<i64: 1, 1>, scalar_prefetch = 0 : i64, scratch_operands = 0 : i64, tpu.core_type = #tpu.core_type<tc>, window_params = [{transform_indices = @transform_0, window_bounds = array<i64: 8, 256>}, {transform_indices = @transform_1, window_bounds = array<i64: 8, 1>}, {transform_indices = @transform_2, window_bounds = array<i64: 8, 256>}]} {
    %c0 = arith.constant 0 : index
    %c0_0 = arith.constant 0 : index
    %0 = vector.load %arg3[%c0, %c0_0] : memref<8x1xf32, #tpu.memory_space<vmem>>, vector<8x1xf32>
    %c0_1 = arith.constant 0 : index
    %c0_2 = arith.constant 0 : index
    %1 = vector.load %arg2[%c0_1, %c0_2] : memref<8x256xf32, #tpu.memory_space<vmem>>, vector<8x256xf32>
    %2 = vector.broadcast %0 : vector<8x1xf32> to vector<8x256xf32>
    %3 = arith.mulf %1, %2 : vector<8x256xf32>
    %c0_3 = arith.constant 0 : index
    %c0_4 = arith.constant 0 : index
    %4 = vector.load %arg4[%c0_3, %c0_4] : memref<8x256xf32, #tpu.memory_space<vmem>>, vector<8x256xf32>
    tpu.vector_store %arg4[%c0_3, %c0_4], %3 {strides = array<i32>} : memref<8x256xf32, #tpu.memory_space<vmem>>, vector<8x256xf32>,
    return
  }
  func.func @transform_0(%arg0: i32, %arg1: i32) -> (i32, i32) {
    %c0_i32 = arith.constant 0 : i32
    return %arg0, %arg1 : i32, i32
  }
  func.func @transform_1(%arg0: i32, %arg1: i32) -> (i32, i32) {
    %c0_i32 = arith.constant 0 : i32
    %c0_i32_0 = arith.constant 0 : i32
    return %arg0, %c0_i32 : i32, i32
  }
  func.func @transform_2(%arg0: i32, %arg1: i32) -> (i32, i32) {
    %c0_i32 = arith.constant 0 : i32
    return %arg0, %arg1 : i32, i32
  }
}

</mosaic_0001>

<llo_original>
// kernel: tpu_custom_call.1
$region0: #{tpu_custom_call.1}
  #allocation0 [shape = 'u32[]', space=smem, size = 0x4, offset = 0x4, fixed_abs, tag = 'smem constant byte address 0x4 - core index']
  #allocation1 [shape = 'u32[144,128]{1,0:T(1,128)}', space=vmem, size = 0x12000, scoped, tag = 'internal scratch']
  %s0 = inlined_call_operand.hbm [shape: f32[8,256], index: 0, kind: input, shape index: {}]
  %s1 = inlined_call_operand.vmem [shape: f32[8,1], index: 1, kind: input, shape index: {}]
  %s2 = inlined_call_operand.hbm [shape: f32[8,256], index: 2, kind: output, shape index: {}]
  %s3 = sld [smem:[#allocation0]]
  $region22: #{tpu_custom_call.1} parent=0
    _
  %s5 = ssub.s32 1, %s3
  %s6 = scalar_select 0, %s5, %s3
  $region1: #{tpu_custom_call.1} parent=0
    #allocation2 [shape = 'u8[8192]{0}', space=vmem, size = 0x2000, scoped, tag = 'input window, operand 0, single buffered']
    #allocation3 [shape = 's32[1]{0}', space=sflag, size = 0x4, scoped, tag = 'scoped memory for tpu_custom_call.1']
    #allocation4 [shape = 's32[1]{0}', space=sflag, size = 0x4, scoped, tag = 'scoped memory for tpu_custom_call.1']
    #allocation5 [shape = 'u8[8192]{0}', space=vmem, size = 0x2000, scoped, tag = 'output window, operand 0, single buffered']
    %7 = vsyncpa [#allocation3], 0
    %8 = vsyncpa [#allocation4], 0
    // Predicated region
    $region2: #{tpu_custom_call.1} parent=1 // pred_check
      _
    $region3: #{tpu_custom_call.1} parent=1 // pred_check_branch
      %10 = sbr.rel (0) target = $region5
    $region4: #{tpu_custom_call.1} parent=1 // pred_region
      %s12 = ssub.s32 256, 256
      %13 = vsyncadd [#allocation3], %s12
      %s15 = sshll.u32 [#allocation2], 4
      %s16 = int_to_ptr.vmem [resolvable:$true] %s15
      %18 = dma.hbm_to_vmem [thread:$0]  %s0, 256, %s16, [#allocation3]
    $region5: #{tpu_custom_call.1} parent=1 // pred_fallthru
      _
    // Predicated region
    $region6: #{tpu_custom_call.1} parent=1 // pred_check
      _
    $region7: #{tpu_custom_call.1} parent=1 // pred_check_branch
      %20 = sbr.rel (0) target = $region9
    $region8: #{tpu_custom_call.1} parent=1 // pred_region
      _
    $region9: #{tpu_custom_call.1} parent=1 // pred_fallthru
      _
    // Predicated region
    $region10: #{tpu_custom_call.1} parent=1 // pred_check
      _
    $region11: #{tpu_custom_call.1} parent=1 // pred_check_branch
      %22 = sbr.rel (0) target = $region13
    $region12: #{tpu_custom_call.1} parent=1 // pred_region
      %23 = dma.done [#allocation3], 256
    $region13: #{tpu_custom_call.1} parent=1 // pred_fallthru
      _
    %v24 = vld [vmem:[%s1] sm:$0xff]
    %v25 = vld [vmem:[#allocation2] sm:$0xff]
    %v26 = vld [vmem:[#allocation2 + $0x8] sm:$0xff]
    %28 = vset.pattern.permute.xlu0 0
    %29 = vperm.xlu0 %28, %v24
    %v30 = vpop.permute.xlu0 %29
    %v32 = vmul.f32 %v25, %v30
    %v33 = vmul.f32 %v26, %v30
    %34 = vst [vmem:[#allocation5] sm:$0xff] %v32
    %35 = vst [vmem:[#allocation5 + $0x8] sm:$0xff] %v33
    // Predicated region
    $region14: #{tpu_custom_call.1} parent=1 // pred_check
      _
    $region15: #{tpu_custom_call.1} parent=1 // pred_check_branch
      %37 = sbr.rel (0) target = $region17
    $region16: #{tpu_custom_call.1} parent=1 // pred_region
      %s39 = ssub.s32 256, 256
      %40 = vsyncadd [#allocation4], %s39
      %s42 = sshll.u32 [#allocation5], 4
      %s43 = int_to_ptr.vmem [resolvable:$true] %s42
      %45 = dma.vmem_to_hbm [thread:$0]  %s43, 256, %s2, [#allocation4]
    $region17: #{tpu_custom_call.1} parent=1 // pred_fallthru
      _
    // Predicated region
    $region18: #{tpu_custom_call.1} parent=1 // pred_check
      _
    $region19: #{tpu_custom_call.1} parent=1 // pred_check_branch
      %47 = sbr.rel (0) target = $region21
    $region20: #{tpu_custom_call.1} parent=1 // pred_region
      %48 = dma.done [#allocation4], 256
    $region21: #{tpu_custom_call.1} parent=1 // pred_fallthru
      _
    %49 = vsyncpa [#allocation3], 1
    %50 = vsyncpa [#allocation4], 1

</llo_original>
